<compile_context>
chip_gen: v5e
topology: v5e:2x2
jax: 0.10.0
libtpu: 0.0.40
codegen_flags: <defaults>
</compile_context>

<pallas_src>
import math
import functools

import jax
import jax.numpy as jnp
from jax.experimental import pallas as pl
from jax.experimental.pallas import tpu as pltpu


_INV_SQRT2 = 1.0 / math.sqrt(2.0)


def _erf_f32(x):
    """Polynomial erf (Abramowitz & Stegun 7.1.26), |abs error| <= 1.5e-7."""
    p = 0.3275911
    a1, a2, a3, a4, a5 = (0.254829592, -0.284496736, 1.421413741,
                          -1.453152027, 1.061405429)
    ax = jnp.abs(x)
    t = 1.0 / (1.0 + p * ax)
    poly = ((((a5 * t + a4) * t + a3) * t + a2) * t + a1) * t
    y = 1.0 - poly * jnp.exp(-ax * ax)
    return jnp.where(x < 0.0, -y, y)


def _gelu_f32(x):
    return x * 0.5 * (1.0 + _erf_f32(x * _INV_SQRT2))


def _ffn_kernel(x_ref, w1_ref, b1_ref, w2_ref, b2_ref, o_ref, acc_ref):
    """One (row-tile, hidden-slice) step of the fused FFN.

    acc_ref: f32 VMEM scratch (tm, D) that accumulates the ff2 partial
    products over the hidden axis (grid axis 1, "arbitrary").
    """
    k = pl.program_id(1)

    @pl.when(k == 0)
    def _():
        acc_ref[...] = jnp.zeros_like(acc_ref)

    # ff1 on this hidden slice: (tm, D) @ (D, tkh) -> (tm, tkh), f32 on MXU.
    h = jnp.dot(x_ref[...], w1_ref[...], preferred_element_type=jnp.float32)
    h = h + b1_ref[...].astype(jnp.float32)          # (1, tkh) broadcast
    g = _gelu_f32(h)                                 # exact-erf GELU in f32

    # ff2 partial product, accumulated in f32 VMEM (hidden never hits HBM).
    acc_ref[...] += jnp.dot(g.astype(w2_ref.dtype), w2_ref[...],
                            preferred_element_type=jnp.float32)

    # Final hidden slice: add b2, cast, lane-dense store of the (tm, D) tile.
    @pl.when(k == pl.num_programs(1) - 1)
    def _():
        o_ref[...] = (acc_ref[...] +
                      b2_ref[...].astype(jnp.float32)).astype(o_ref.dtype)


def _round_up(a, m):
    return ((a + m - 1) // m) * m


@functools.partial(jax.jit,
                   static_argnames=("block_rows", "block_hidden",
                                    "compute_dtype"))
def positionwise_feed_forward(x, w1, b1, w2, b2, *,
                              block_rows=256, block_hidden=512,
                              compute_dtype=None):
    """Fused y = ff2(gelu(ff1(x))); dropout = identity (eval mode).

    x  : (B, S, D)
    w1 : (D, Dff),  b1 : (Dff,)     (== torch ff1.weight.T, ff1.bias)
    w2 : (Dff, D),  b2 : (D,)       (== torch ff2.weight.T, ff2.bias)
    compute_dtype : optional dtype (e.g. jnp.bfloat16) for x/W1/W2 on the MXU;
                    accumulation, bias-add and GELU always happen in f32.
    """
    B, S, D = x.shape
    Dff = w1.shape[1]
    assert w1.shape == (D, Dff) and w2.shape == (Dff, D)
    assert b1.shape == (Dff,) and b2.shape == (D,)

    out_dtype = x.dtype
    M = B * S
    x2 = x.reshape(M, D)                       # lane-dense (rows, D) layout

    # --- TPU-friendly padded sizes & tile choices --------------------------
    tm = min(block_rows, _round_up(M, 8))      # row tile, multiple of 8
    Mp = _round_up(M, tm)
    Dp = _round_up(D, 128)                     # model dim lives in lanes
    tkh = min(block_hidden, _round_up(Dff, 128))
    Dffp = _round_up(Dff, tkh)

    x2p = jnp.pad(x2, ((0, Mp - M), (0, Dp - D)))
    w1p = jnp.pad(w1, ((0, Dp - D), (0, Dffp - Dff)))
    b1p = jnp.pad(b1, (0, Dffp - Dff)).reshape(1, Dffp)
    w2p = jnp.pad(w2, ((0, Dffp - Dff), (0, Dp - D)))
    b2p = jnp.pad(b2, (0, Dp - D)).reshape(1, Dp)

    if compute_dtype is not None:
        x2p = x2p.astype(compute_dtype)
        w1p = w1p.astype(compute_dtype)
        w2p = w2p.astype(compute_dtype)

    grid = (Mp // tm, Dffp // tkh)

    # VMEM budget: double-buffered inputs/outputs + f32 accumulator, with
    # headroom; clamped so generation-default scoped limits still work.
    itemsize = x2p.dtype.itemsize
    est = (2 * itemsize * (tm * Dp + Dp * tkh + tkh + tkh * Dp + Dp + tm * Dp)
           + 4 * tm * Dp)
    vmem_limit = int(min(max(est * 5 // 4, 32 * 1024 * 1024),
                         96 * 1024 * 1024))

    out = pl.pallas_call(
        _ffn_kernel,
        out_shape=jax.ShapeDtypeStruct((Mp, Dp), out_dtype),
        grid_spec=pltpu.PrefetchScalarGridSpec(
            num_scalar_prefetch=0,
            grid=grid,
            in_specs=[
                pl.BlockSpec((tm, Dp), lambda i, k: (i, 0)),    # x row tile
                pl.BlockSpec((Dp, tkh), lambda i, k: (0, k)),   # W1 slice
                pl.BlockSpec((1, tkh), lambda i, k: (0, k)),    # b1 slice
                pl.BlockSpec((tkh, Dp), lambda i, k: (k, 0)),   # W2 slice
                pl.BlockSpec((1, Dp), lambda i, k: (0, 0)),     # b2 (resident)
            ],
            out_specs=pl.BlockSpec((tm, Dp), lambda i, k: (i, 0)),
            scratch_shapes=[pltpu.VMEM((tm, Dp), jnp.float32)],
        ),
        compiler_params=pltpu.CompilerParams(
            dimension_semantics=("parallel", "arbitrary"),
            vmem_limit_bytes=vmem_limit,
        ),
    )(x2p, w1p, b1p, w2p, b2p)

    return out[:M, :D].reshape(B, S, D)


def _reference(x, w1, b1, w2, b2):
    """Pure-JAX reference matching the PyTorch module (eval mode)."""
    h = jnp.einsum("bsd,df->bsf", x, w1) + b1
    g = h * 0.5 * (1.0 + jax.lax.erf(h / math.sqrt(2.0)))
    return jnp.einsum("bsf,fd->bsd", g, w2) + b2


if __name__ == "__main__":
    key = jax.random.PRNGKey(0)
    B, S, D, Dff = 2, 8, 32, 64
    k1, k2, k3, k4, k5 = jax.random.split(key, 5)
    x = jax.random.normal(k1, (B, S, D), dtype=jnp.float32)
    w1 = jax.random.normal(k2, (D, Dff), dtype=jnp.float32) / math.sqrt(D)
    b1 = 0.1 * jax.random.normal(k3, (Dff,), dtype=jnp.float32)
    w2 = jax.random.normal(k4, (Dff, D), dtype=jnp.float32) / math.sqrt(Dff)
    b2 = 0.1 * jax.random.normal(k5, (D,), dtype=jnp.float32)

    # f32 path (matches the PyTorch reference closely).
    y = jax.block_until_ready(positionwise_feed_forward(x, w1, b1, w2, b2))
    y_ref = _reference(x, w1, b1, w2, b2)
    if not jnp.allclose(y, y_ref, atol=2e-4, rtol=2e-4):
        raise AssertionError(
            f"f32 mismatch: max abs err = {jnp.max(jnp.abs(y - y_ref))}")

    # bf16 MXU path (f32 accumulation), looser tolerance.
    y_bf16 = jax.block_until_ready(
        positionwise_feed_forward(x, w1, b1, w2, b2,
                                  compute_dtype=jnp.bfloat16))
    if not jnp.allclose(y_bf16, y_ref, atol=5e-2, rtol=5e-2):
        raise AssertionError(
            f"bf16 mismatch: max abs err = {jnp.max(jnp.abs(y_bf16 - y_ref))}")

    print("KERNEL_OK")
</pallas_src>

<mosaic_0001>
module attributes {stable_mosaic.version = 11 : i64} {
  func.func @_ffn_kernel(%arg0: i32, %arg1: i32, %arg2: memref<16x128xf32, #tpu.memory_space<vmem>>, %arg3: memref<128x128xf32, #tpu.memory_space<vmem>>, %arg4: memref<1x128xf32, #tpu.memory_space<vmem>>, %arg5: memref<128x128xf32, #tpu.memory_space<vmem>>, %arg6: memref<1x128xf32, #tpu.memory_space<vmem>>, %arg7: memref<16x128xf32, #tpu.memory_space<vmem>>, %arg8: memref<16x128xf32, #tpu.memory_space<vmem>>) attributes {dimension_semantics = [#tpu.dimension_semantics<parallel>, #tpu.dimension_semantics<arbitrary>], iteration_bounds = array<i64: 1, 1>, scalar_prefetch = 0 : i64, scratch_operands = 1 : i64, tpu.core_type = #tpu.core_type<tc>, window_params = [{transform_indices = @transform_0, window_bounds = array<i64: 16, 128>}, {transform_indices = @transform_1, window_bounds = array<i64: 128, 128>}, {transform_indices = @transform_2, window_bounds = array<i64: 1, 128>}, {transform_indices = @transform_3, window_bounds = array<i64: 128, 128>}, {pipeline_mode = #tpu.pipeline_mode<synchronous>, transform_indices = @transform_4, window_bounds = array<i64: 1, 128>}, {transform_indices = @transform_5, window_bounds = array<i64: 16, 128>}]} {
    %c0_i32 = arith.constant 0 : i32
    %0 = arith.cmpi eq, %arg1, %c0_i32 : i32
    %1 = arith.extui %0 : i1 to i32
    %c0_i32_0 = arith.constant 0 : i32
    %2 = arith.cmpi ne, %1, %c0_i32_0 : i32
    scf.if %2 {
      %cst_30 = arith.constant 0.000000e+00 : f32
      %57 = vector.broadcast %cst_30 : f32 to vector<16x128xf32>
      %c0_31 = arith.constant 0 : index
      %c0_32 = arith.constant 0 : index
      %58 = vector.load %arg8[%c0_31, %c0_32] : memref<16x128xf32, #tpu.memory_space<vmem>>, vector<16x128xf32>
      tpu.vector_store %arg8[%c0_31, %c0_32], %57 {strides = array<i32>} : memref<16x128xf32, #tpu.memory_space<vmem>>, vector<16x128xf32>,
    } else {
    }
    %c0 = arith.constant 0 : index
    %c0_1 = arith.constant 0 : index
    %3 = vector.load %arg2[%c0, %c0_1] : memref<16x128xf32, #tpu.memory_space<vmem>>, vector<16x128xf32>
    %c0_2 = arith.constant 0 : index
    %c0_3 = arith.constant 0 : index
    %4 = vector.load %arg3[%c0_2, %c0_3] : memref<128x128xf32, #tpu.memory_space<vmem>>, vector<128x128xf32>
    %cst = arith.constant dense<0.000000e+00> : vector<16x128xf32>
    %5 = tpu.matmul %3, %4, %cst {dimension_numbers = #tpu.dot_dimension_numbers<[1], [0], [0], [1], [0, 0, 1, 1], [], []>} : vector<16x128xf32>, vector<128x128xf32>, vector<16x128xf32> -> vector<16x128xf32>
    %c0_4 = arith.constant 0 : index
    %c0_5 = arith.constant 0 : index
    %6 = vector.load %arg4[%c0_4, %c0_5] : memref<1x128xf32, #tpu.memory_space<vmem>>, vector<1x128xf32>
    %7 = vector.broadcast %6 : vector<1x128xf32> to vector<16x128xf32>
    %8 = arith.addf %5, %7 : vector<16x128xf32>
    %cst_6 = arith.constant 5.000000e-01 : f32
    %9 = vector.broadcast %cst_6 : f32 to vector<16x128xf32>
    %10 = arith.mulf %8, %9 : vector<16x128xf32>
    %cst_7 = arith.constant 0.707106769 : f32
    %11 = vector.broadcast %cst_7 : f32 to vector<16x128xf32>
    %12 = arith.mulf %8, %11 : vector<16x128xf32>
    %13 = math.absf %12 : vector<16x128xf32>
    %cst_8 = arith.constant 0.327591091 : f32
    %14 = vector.broadcast %cst_8 : f32 to vector<16x128xf32>
    %15 = arith.mulf %14, %13 : vector<16x128xf32>
    %cst_9 = arith.constant 1.000000e+00 : f32
    %16 = vector.broadcast %cst_9 : f32 to vector<16x128xf32>
    %17 = arith.addf %16, %15 : vector<16x128xf32>
    %cst_10 = arith.constant 1.000000e+00 : f32
    %18 = vector.broadcast %cst_10 : f32 to vector<16x128xf32>
    %19 = arith.divf %18, %17 : vector<16x128xf32>
    %cst_11 = arith.constant 1.06140542 : f32
    %20 = vector.broadcast %cst_11 : f32 to vector<16x128xf32>
    %21 = arith.mulf %20, %19 : vector<16x128xf32>
    %cst_12 = arith.constant -1.45315206 : f32
    %22 = vector.broadcast %cst_12 : f32 to vector<16x128xf32>
    %23 = arith.addf %21, %22 : vector<16x128xf32>
    %24 = arith.mulf %23, %19 : vector<16x128xf32>
    %cst_13 = arith.constant 1.42141378 : f32
    %25 = vector.broadcast %cst_13 : f32 to vector<16x128xf32>
    %26 = arith.addf %24, %25 : vector<16x128xf32>
    %27 = arith.mulf %26, %19 : vector<16x128xf32>
    %cst_14 = arith.constant -0.284496725 : f32
    %28 = vector.broadcast %cst_14 : f32 to vector<16x128xf32>
    %29 = arith.addf %27, %28 : vector<16x128xf32>
    %30 = arith.mulf %29, %19 : vector<16x128xf32>
    %cst_15 = arith.constant 0.254829586 : f32
    %31 = vector.broadcast %cst_15 : f32 to vector<16x128xf32>
    %32 = arith.addf %30, %31 : vector<16x128xf32>
    %33 = arith.mulf %32, %19 : vector<16x128xf32>
    %cst_16 = arith.constant 0.000000e+00 : f32
    %34 = vector.broadcast %cst_16 : f32 to vector<16x128xf32>
    %35 = arith.subf %34, %13 : vector<16x128xf32>
    %36 = arith.mulf %35, %13 : vector<16x128xf32>
    %37 = math.exp %36 : vector<16x128xf32>
    %38 = arith.mulf %33, %37 : vector<16x128xf32>
    %cst_17 = arith.constant 1.000000e+00 : f32
    %39 = vector.broadcast %cst_17 : f32 to vector<16x128xf32>
    %40 = arith.subf %39, %38 : vector<16x128xf32>
    %cst_18 = arith.constant 0.000000e+00 : f32
    %41 = vector.broadcast %cst_18 : f32 to vector<16x128xf32>
    %42 = arith.cmpf olt, %12, %41 : vector<16x128xf32>
    %cst_19 = arith.constant 0.000000e+00 : f32
    %43 = vector.broadcast %cst_19 : f32 to vector<16x128xf32>
    %44 = arith.subf %43, %40 : vector<16x128xf32>
    %45 = arith.select %42, %44, %40 : vector<16x128xi1>, vector<16x128xf32>
    %cst_20 = arith.constant 1.000000e+00 : f32
    %46 = vector.broadcast %cst_20 : f32 to vector<16x128xf32>
    %47 = arith.addf %46, %45 : vector<16x128xf32>
    %48 = arith.mulf %10, %47 : vector<16x128xf32>
    %c0_21 = arith.constant 0 : index
    %c0_22 = arith.constant 0 : index
    %49 = vector.load %arg8[%c0_21, %c0_22] : memref<16x128xf32, #tpu.memory_space<vmem>>, vector<16x128xf32>
    %c0_23 = arith.constant 0 : index
    %c0_24 = arith.constant 0 : index
    %50 = vector.load %arg5[%c0_23, %c0_24] : memref<128x128xf32, #tpu.memory_space<vmem>>, vector<128x128xf32>
    %cst_25 = arith.constant dense<0.000000e+00> : vector<16x128xf32>
    %51 = tpu.matmul %48, %50, %cst_25 {dimension_numbers = #tpu.dot_dimension_numbers<[1], [0], [0], [1], [0, 0, 1, 1], [], []>} : vector<16x128xf32>, vector<128x128xf32>, vector<16x128xf32> -> vector<16x128xf32>
    %52 = arith.addf %49, %51 : vector<16x128xf32>
    %c0_26 = arith.constant 0 : index
    %c0_27 = arith.constant 0 : index
    %53 = vector.load %arg8[%c0_26, %c0_27] : memref<16x128xf32, #tpu.memory_space<vmem>>, vector<16x128xf32>
    tpu.vector_store %arg8[%c0_26, %c0_27], %52 {strides = array<i32>} : memref<16x128xf32, #tpu.memory_space<vmem>>, vector<16x128xf32>,
    %c0_i32_28 = arith.constant 0 : i32
    %54 = arith.cmpi eq, %arg1, %c0_i32_28 : i32
    %55 = arith.extui %54 : i1 to i32
    %c0_i32_29 = arith.constant 0 : i32
    %56 = arith.cmpi ne, %55, %c0_i32_29 : i32
    scf.if %56 {
      %c0_30 = arith.constant 0 : index
      %c0_31 = arith.constant 0 : index
      %57 = vector.load %arg8[%c0_30, %c0_31] : memref<16x128xf32, #tpu.memory_space<vmem>>, vector<16x128xf32>
      %c0_32 = arith.constant 0 : index
      %c0_33 = arith.constant 0 : index
      %58 = vector.load %arg6[%c0_32, %c0_33] : memref<1x128xf32, #tpu.memory_space<vmem>>, vector<1x128xf32>
      %59 = vector.broadcast %58 : vector<1x128xf32> to vector<16x128xf32>
      %60 = arith.addf %57, %59 : vector<16x128xf32>
      %c0_34 = arith.constant 0 : index
      %c0_35 = arith.constant 0 : index
      %61 = vector.load %arg7[%c0_34, %c0_35] : memref<16x128xf32, #tpu.memory_space<vmem>>, vector<16x128xf32>
      tpu.vector_store %arg7[%c0_34, %c0_35], %60 {strides = array<i32>} : memref<16x128xf32, #tpu.memory_space<vmem>>, vector<16x128xf32>,
    } else {
    }
    return
  }
  func.func @transform_0(%arg0: i32, %arg1: i32) -> (i32, i32) {
    %c0_i32 = arith.constant 0 : i32
    %c0_i32_0 = arith.constant 0 : i32
    return %arg0, %c0_i32 : i32, i32
  }
  func.func @transform_1(%arg0: i32, %arg1: i32) -> (i32, i32) {
    %c0_i32 = arith.constant 0 : i32
    %c0_i32_0 = arith.constant 0 : i32
    return %c0_i32, %arg1 : i32, i32
  }
  func.func @transform_2(%arg0: i32, %arg1: i32) -> (i32, i32) {
    %c0_i32 = arith.constant 0 : i32
    %c0_i32_0 = arith.constant 0 : i32
    return %c0_i32, %arg1 : i32, i32
  }
  func.func @transform_3(%arg0: i32, %arg1: i32) -> (i32, i32) {
    %c0_i32 = arith.constant 0 : i32
    %c0_i32_0 = arith.constant 0 : i32
    return %arg1, %c0_i32 : i32, i32
  }
  func.func @transform_4(%arg0: i32, %arg1: i32) -> (i32, i32) {
    %c0_i32 = arith.constant 0 : i32
    %c0_i32_0 = arith.constant 0 : i32
    %c0_i32_1 = arith.constant 0 : i32
    return %c0_i32, %c0_i32_0 : i32, i32
  }
  func.func @transform_5(%arg0: i32, %arg1: i32) -> (i32, i32) {
    %c0_i32 = arith.constant 0 : i32
    %c0_i32_0 = arith.constant 0 : i32
    return %arg0, %c0_i32 : i32, i32
  }
}

</mosaic_0001>

<llo_original>
// kernel: positionwise_feed_forward.1
$region0: #{positionwise_feed_forward.1}
  #allocation0 [shape = 'u32[]', space=smem, size = 0x4, offset = 0x4, fixed_abs, tag = 'smem constant byte address 0x4 - core index']
  #allocation1 [shape = 'u32[72,128]{1,0:T(1,128)}', space=vmem, size = 0x9000, scoped, tag = 'internal scratch']
  #allocation2 [shape = 'f32[16,128]{1,0:T(8,128)}', space=vmem, size = 0x2000, scoped, tag = 'scratch operand']
  %s0 = inlined_call_operand.vmem [shape: f32[16,128], index: 0, kind: input, shape index: {}]
  %s1 = inlined_call_operand.vmem [shape: f32[128,128], index: 1, kind: input, shape index: {}]
  %s2 = inlined_call_operand.vmem [shape: f32[1,128], index: 2, kind: input, shape index: {}]
  %s3 = inlined_call_operand.vmem [shape: f32[128,128], index: 3, kind: input, shape index: {}]
  %s4 = inlined_call_operand.vmem [shape: f32[1,128], index: 4, kind: input, shape index: {}]
  %s5 = inlined_call_operand.vmem [shape: f32[16,128], index: 5, kind: output, shape index: {}]
  %s6 = sld [smem:[#allocation0]]
  $region38: #{positionwise_feed_forward.1} parent=0
    _
  %s8 = ssub.s32 1, %s6
  %s9 = scalar_select 0, %s8, %s6
  // Predicated region
  $region2: #{positionwise_feed_forward.1} parent=0 // pred_check
    _
  $region3: #{positionwise_feed_forward.1} parent=0 // pred_check_branch
    %11 = sbr.rel (0) target = $region5
  $region4: #{positionwise_feed_forward.1} parent=0 // pred_region
    _
  $region5: #{positionwise_feed_forward.1} parent=0 // pred_fallthru
    _
  // Predicated region
  $region6: #{positionwise_feed_forward.1} parent=0 // pred_check
    _
  $region7: #{positionwise_feed_forward.1} parent=0 // pred_check_branch
    %13 = sbr.rel (0) target = $region9
  $region8: #{positionwise_feed_forward.1} parent=0 // pred_region
    _
  $region9: #{positionwise_feed_forward.1} parent=0 // pred_fallthru
    _
  // Predicated region
  $region10: #{positionwise_feed_forward.1} parent=0 // pred_check
    _
  $region11: #{positionwise_feed_forward.1} parent=0 // pred_check_branch
    %15 = sbr.rel (0) target = $region13
  $region12: #{positionwise_feed_forward.1} parent=0 // pred_region
    _
  $region13: #{positionwise_feed_forward.1} parent=0 // pred_fallthru
    _
  // Predicated region
  $region14: #{positionwise_feed_forward.1} parent=0 // pred_check
    _
  $region15: #{positionwise_feed_forward.1} parent=0 // pred_check_branch
    %17 = sbr.rel (0) target = $region17
  $region16: #{positionwise_feed_forward.1} parent=0 // pred_region
    _
  $region17: #{positionwise_feed_forward.1} parent=0 // pred_fallthru
    _
  // Predicated region
  $region18: #{positionwise_feed_forward.1} parent=0 // pred_check
    _
  $region19: #{positionwise_feed_forward.1} parent=0 // pred_check_branch
    %19 = sbr.rel (0) target = $region21
  $region20: #{positionwise_feed_forward.1} parent=0 // pred_region
    _
  $region21: #{positionwise_feed_forward.1} parent=0 // pred_fallthru
    _
  %p20 = scmp.eq.s32.totalorder 0, 0
  // Predicated region
  $region22: #{positionwise_feed_forward.1} parent=0 // pred_check
    %p21 = pneg %p20
  $region23: #{positionwise_feed_forward.1} parent=0 // pred_check_branch
    %23 = sbr.rel (%p21) target = $region25
  $region24: #{positionwise_feed_forward.1} parent=0 // pred_region
    %24 = vst [vmem:[#allocation2] sm:$0xff] 0.0
    %25 = vst [vmem:[#allocation2 + $0x8] sm:$0xff] 0.0
  $region25: #{positionwise_feed_forward.1} parent=0 // pred_fallthru
    _
  %v26 = vld [vmem:[%s0] sm:$0xff]
  %v27 = vld [vmem:[%s0 + $0x8] sm:$0xff]
  %v28 = vld [vmem:[%s1] sm:$0xff]
  %v29 = vld [vmem:[%s1 + $0x8] sm:$0xff]
  %v30 = vld [vmem:[%s1 + $0x10] sm:$0xff]
  %v31 = vld [vmem:[%s1 + $0x18] sm:$0xff]
  %v32 = vld [vmem:[%s1 + $0x20] sm:$0xff]
  %v33 = vld [vmem:[%s1 + $0x28] sm:$0xff]
  %v34 = vld [vmem:[%s1 + $0x30] sm:$0xff]
  %v35 = vld [vmem:[%s1 + $0x38] sm:$0xff]
  %v36 = vld [vmem:[%s1 + $0x40] sm:$0xff]
  %v37 = vld [vmem:[%s1 + $0x48] sm:$0xff]
  %v38 = vld [vmem:[%s1 + $0x50] sm:$0xff]
  %v39 = vld [vmem:[%s1 + $0x58] sm:$0xff]
  %v40 = vld [vmem:[%s1 + $0x60] sm:$0xff]
  %v41 = vld [vmem:[%s1 + $0x68] sm:$0xff]
  %v42 = vld [vmem:[%s1 + $0x70] sm:$0xff]
  %v43 = vld [vmem:[%s1 + $0x78] sm:$0xff]
  %v44 = vld [vmem:[%s2] sm:$0x1]
  %v46 = vperm.slane %v44, 0
  %48 = vmatpush.msra.mxu0 %v43
  %49 = vmatpush.msra.mxu0 %v42
  %50 = vmatpush.msra.mxu0 %v41
  %51 = vmatpush.msra.mxu0 %v40
  %52 = vmatpush.msra.mxu0 %v39
  %53 = vmatpush.msra.mxu0 %v38
  %54 = vmatpush.msra.mxu0 %v37
  %55 = vmatpush.msra.mxu0 %v36
  %56 = vmatpush.msra.mxu0 %v35
  %57 = vmatpush.msra.mxu0 %v34
  %58 = vmatpush.msra.mxu0 %v33
  %59 = vmatpush.msra.mxu0 %v32
  %60 = vmatpush.msra.mxu0 %v31
  %61 = vmatpush.msra.mxu0 %v30
  %62 = vmatpush.msra.mxu0 %v29
  %63 = vmatpush.msra.mxu0 %v28
  %64 = vmatmul.f32.gmra.mxu0 %v26
  %v65 = vpop.f32.mrf.mxu0
  %v66 = vadd.f32 %v46, %v65
  %67 = vmatmul.f32.gmra.mxu0 %v27
  %v68 = vpop.f32.mrf.mxu0
  %v69 = vadd.f32 %v46, %v68
  %70 = vdwg.mxu0
  %v71 = vmul.f32 %v66, 0.5
  %v72 = vmul.f32 %v69, 0.5
  %v73 = vmul.f32 %v66, 0.70710677
  %v74 = vmul.f32 %v69, 0.70710677
  %v75 = vand.u32 2147483647, %v73
  %v76 = vand.u32 2147483647, %v74
  %v77 = vmul.f32 %v75, 0.3275911
  %v78 = vmul.f32 %v76, 0.3275911
  %v79 = vadd.f32 %v77, 1.0
  %v80 = vadd.f32 %v78, 1.0
  %v81 = vrcp.pop %v79
  %v82 = vmul.f32 %v79, %v81
  %v83 = vsub.f32 1.0, %v82
  %v84 = vmul.f32 %v81, %v83
  %v85 = vadd.f32 %v81, %v84
  %vm86 = vweird.f32 %v79
  %vm87 = vweird.f32 %v81
  %vm88 = vmor %vm86, %vm87
  %v89 = vsel %vm88, %v81, %v85
  %v90 = vand.u32 2147483647, %v79
  %vm91 = vcmp.eq.f32.partialorder %v90, 8.507059e+37
  %v92 = vand.u32 %v79, 2147483648
  %v93 = vor.u32 1.1754944e-38, %v92
  %v94 = vsel %vm91, %v93, %v89
  %v95 = vmul.f32 1.0, %v94
  %v96 = vrcp.pop %v80
  %v97 = vmul.f32 %v80, %v96
  %v98 = vsub.f32 1.0, %v97
  %v99 = vmul.f32 %v96, %v98
  %v100 = vadd.f32 %v96, %v99
  %vm101 = vweird.f32 %v80
  %vm102 = vweird.f32 %v96
  %vm103 = vmor %vm101, %vm102
  %v104 = vsel %vm103, %v96, %v100
  %v105 = vand.u32 2147483647, %v80
  %vm106 = vcmp.eq.f32.partialorder %v105, 8.507059e+37
  %v107 = vand.u32 %v80, 2147483648
  %v108 = vor.u32 1.1754944e-38, %v107
  %v109 = vsel %vm106, %v108, %v104
  %v110 = vmul.f32 1.0, %v109
  %v111 = vmul.f32 %v95, 1.0614054
  %v112 = vmul.f32 %v110, 1.0614054
  %v113 = vadd.f32 %v111, -1.4531521
  %v114 = vadd.f32 %v112, -1.4531521
  %v115 = vmul.f32 %v113, %v95
  %v116 = vmul.f32 %v114, %v110
  %v117 = vadd.f32 %v115, 1.4214138
  %v118 = vadd.f32 %v116, 1.4214138
  %v119 = vmul.f32 %v117, %v95
  %v120 = vmul.f32 %v118, %v110
  %v121 = vadd.f32 %v119, -0.28449672
  %v122 = vadd.f32 %v120, -0.28449672
  %v123 = vmul.f32 %v121, %v95
  %v124 = vmul.f32 %v122, %v110
  %v125 = vadd.f32 %v123, 0.2548296
  %v126 = vadd.f32 %v124, 0.2548296
  %v127 = vmul.f32 %v125, %v95
  %v128 = vmul.f32 %v126, %v110
  %v129 = vsub.f32 0.0, %v75
  %v130 = vsub.f32 0.0, %v76
  %v131 = vmul.f32 %v129, %v75
  %v132 = vmul.f32 %v130, %v76
  %v133 = vmul.f32 %v131, 1.442695
  %v134 = vpow.pop %v133
  %v135 = vmul.f32 %v132, 1.442695
  %v136 = vpow.pop %v135
  %v137 = vmul.f32 %v127, %v134
  %v138 = vmul.f32 %v128, %v136
  %v139 = vsub.f32 1.0, %v137
  %v140 = vsub.f32 1.0, %v138
  %vm141 = vcmp.lt.f32.partialorder %v73, 0.0
  %vm142 = vcmp.lt.f32.partialorder %v74, 0.0
  %v143 = vsub.f32 0.0, %v139
  %v144 = vsub.f32 0.0, %v140
  %v145 = vsel %vm141, %v143, %v139
  %v146 = vsel %vm142, %v144, %v140
  %v147 = vadd.f32 %v145, 1.0
  %v148 = vadd.f32 %v146, 1.0
  %v149 = vmul.f32 %v71, %v147
  %v150 = vmul.f32 %v72, %v148
  %v151 = vld [vmem:[#allocation2] sm:$0xff]
  %v152 = vld [vmem:[#allocation2 + $0x8] sm:$0xff]
  %v153 = vld [vmem:[%s3] sm:$0xff]
  %v154 = vld [vmem:[%s3 + $0x8] sm:$0xff]
  %v155 = vld [vmem:[%s3 + $0x10] sm:$0xff]
  %v156 = vld [vmem:[%s3 + $0x18] sm:$0xff]
  %v157 = vld [vmem:[%s3 + $0x20] sm:$0xff]
  %v158 = vld [vmem:[%s3 + $0x28] sm:$0xff]
  %v159 = vld [vmem:[%s3 + $0x30] sm:$0xff]
  %v160 = vld [vmem:[%s3 + $0x38] sm:$0xff]
  %v161 = vld [vmem:[%s3 + $0x40] sm:$0xff]
  %v162 = vld [vmem:[%s3 + $0x48] sm:$0xff]
  %v163 = vld [vmem:[%s3 + $0x50] sm:$0xff]
  %v164 = vld [vmem:[%s3 + $0x58] sm:$0xff]
  %v165 = vld [vmem:[%s3 + $0x60] sm:$0xff]
  %v166 = vld [vmem:[%s3 + $0x68] sm:$0xff]
  %v167 = vld [vmem:[%s3 + $0x70] sm:$0xff]
  %v168 = vld [vmem:[%s3 + $0x78] sm:$0xff]
  %169 = vmatpush.msra.mxu0 %v168
  %170 = vmatpush.msra.mxu0 %v167
  %171 = vmatpush.msra.mxu0 %v166
  %172 = vmatpush.msra.mxu0 %v165
  %173 = vmatpush.msra.mxu0 %v164
  %174 = vmatpush.msra.mxu0 %v163
  %175 = vmatpush.msra.mxu0 %v162
  %176 = vmatpush.msra.mxu0 %v161
  %177 = vmatpush.msra.mxu0 %v160
  %178 = vmatpush.msra.mxu0 %v159
  %179 = vmatpush.msra.mxu0 %v158
  %180 = vmatpush.msra.mxu0 %v157
  %181 = vmatpush.msra.mxu0 %v156
  %182 = vmatpush.msra.mxu0 %v155
  %183 = vmatpush.msra.mxu0 %v154
  %184 = vmatpush.msra.mxu0 %v153
  %185 = vmatmul.f32.gmra.mxu0 %v149
  %v186 = vpop.f32.mrf.mxu0
  %v187 = vadd.f32 0.0, %v186
  %188 = vmatmul.f32.gmra.mxu0 %v150
  %v189 = vpop.f32.mrf.mxu0
  %v190 = vadd.f32 0.0, %v189
  %191 = vdwg.mxu0
  %v192 = vadd.f32 %v151, %v187
  %v193 = vadd.f32 %v152, %v190
  %194 = vst [vmem:[#allocation2] sm:$0xff] %v192
  %195 = vst [vmem:[#allocation2 + $0x8] sm:$0xff] %v193
  // Predicated region
  $region26: #{positionwise_feed_forward.1} parent=0 // pred_check
    %p196 = pneg %p20
  $region27: #{positionwise_feed_forward.1} parent=0 // pred_check_branch
    %198 = sbr.rel (%p196) target = $region29
  $region28: #{positionwise_feed_forward.1} parent=0 // pred_region
    %v199 = vld [vmem:[#allocation2] sm:$0xff]
    %v200 = vld [vmem:[#allocation2 + $0x8] sm:$0xff]
    %v201 = vld [vmem:[%s4] sm:$0x1]
    %v203 = vperm.slane %v201, 0
    %v205 = vadd.f32 %v199, %v203
    %v206 = vadd.f32 %v200, %v203
    %207 = vst [vmem:[%s5] sm:$0xff] %v205
    %208 = vst [vmem:[%s5 + $0x8] sm:$0xff] %v206
  $region29: #{positionwise_feed_forward.1} parent=0 // pred_fallthru
    _
  // Predicated region
  $region30: #{positionwise_feed_forward.1} parent=0 // pred_check
    _
  $region31: #{positionwise_feed_forward.1} parent=0 // pred_check_branch
    %210 = sbr.rel (0) target = $region33
  $region32: #{positionwise_feed_forward.1} parent=0 // pred_region
    _
  $region33: #{positionwise_feed_forward.1} parent=0 // pred_fallthru
    _
  // Predicated region
  $region34: #{positionwise_feed_forward.1} parent=0 // pred_check
    _
  $region35: #{positionwise_feed_forward.1} parent=0 // pred_check_branch
    %212 = sbr.rel (0) target = $region37
  $region36: #{positionwise_feed_forward.1} parent=0 // pred_region
    _
  $region37: #{positionwise_feed_forward.1} parent=0 // pred_fallthru
    _

</llo_original>
